<compile_context>
chip_gen: v7x
topology: tpu7x:2x2x1
jax: 0.10.0
libtpu: 0.0.40
codegen_flags: <defaults>
</compile_context>

<pallas_src>
import functools

import jax
import jax.numpy as jnp
from jax.experimental import pallas as pl
from jax.experimental.pallas import tpu as pltpu


# ----------------------------------------------------------------------------
# Pallas kernel: fully fused ACNet forward on one batch tile.
# ----------------------------------------------------------------------------
def _acnet_kernel(n_pi_rem, n_vf_rem, pi1_width, lat_pi, lat_vf, slab_w,
                  x_ref, *refs):
    """refs = (w1_cat, b1_cat,
               w_pi2, b_pi2, ..., w_piN, b_piN,
               w_vf2, b_vf2, ..., w_vfM, b_vfM,
               out_ref)

    The whole two-branch layer stack is fused: the shared input tile feeds one
    concatenated first-layer matmul; intermediate activations stay in
    vregs/VMEM; the two latents are packed into a single lane-dense output
    slab (pi in lanes [0, lat_pi), vf in [lat_pi, lat_pi+lat_vf), zero pad).
    """
    out_ref = refs[-1]
    params = refs[:-1]

    x = x_ref[...]                              # already f32, no cast needed

    # --- fused first layer of both branches: lane-dense (tb, pi1+vf1) ------
    w1 = params[0][...]
    b1 = params[1][...]                         # shape (1, pi1+vf1)
    h0 = jnp.dot(x, w1, preferred_element_type=jnp.float32) + b1
    h0 = jnp.maximum(h0, 0.0)

    h_pi = h0[:, :pi1_width]
    h_vf = h0[:, pi1_width:]

    # --- remaining policy layers -------------------------------------------
    idx = 2
    for _ in range(n_pi_rem):
        w = params[idx][...]
        b = params[idx + 1][...]
        idx += 2
        h_pi = jnp.maximum(
            jnp.dot(h_pi, w, preferred_element_type=jnp.float32) + b, 0.0)

    # --- remaining value layers (may be zero) -------------------------------
    for _ in range(n_vf_rem):
        w = params[idx][...]
        b = params[idx + 1][...]
        idx += 2
        h_vf = jnp.maximum(
            jnp.dot(h_vf, w, preferred_element_type=jnp.float32) + b, 0.0)

    # --- pack both latents into one lane-dense (tb, slab_w) slab ------------
    tb = h_pi.shape[0]
    parts = [h_pi, h_vf]
    pad_w = slab_w - lat_pi - lat_vf
    if pad_w > 0:
        parts.append(jnp.zeros((tb, pad_w), jnp.float32))
    out_ref[...] = jnp.concatenate(parts, axis=-1).astype(out_ref.dtype)


# ----------------------------------------------------------------------------
# Wrapper: one fused pallas_call over batch tiles.
# ----------------------------------------------------------------------------
def acnet_forward(params, features, *, batch_tile=512):
    """Returns (latent_policy, latent_value) exactly like ACNet.forward."""
    pi_w, pi_b = params["pi"]
    vf_w, vf_b = params["vf"]

    B, F = features.shape
    pi1 = pi_w[0].shape[1]
    lat_pi = pi_w[-1].shape[1]
    lat_vf = vf_w[-1].shape[1]
    n_pi_rem = len(pi_w) - 1
    n_vf_rem = len(vf_w) - 1

    # Lane-dense output slab width (multiple of 128).
    slab_w = ((lat_pi + lat_vf + 127) // 128) * 128

    # Fuse first-layer weights/biases of both branches along the output axis.
    w1_cat = jnp.concatenate([pi_w[0], vf_w[0]], axis=1)   # (F, pi1+vf1)
    b1_cat = jnp.concatenate([pi_b[0], vf_b[0]], axis=1)   # (1, pi1+vf1)

    # Batch tile: multiple of 8, no larger than (padded) batch; zero-pad
    # remainder rows so arbitrary batch sizes work.
    tb = min(batch_tile, B)
    tb = max(8, (tb // 8) * 8)
    B_pad = ((B + tb - 1) // tb) * tb
    x = features
    if B_pad != B:
        x = jnp.pad(features, ((0, B_pad - B), (0, 0)))

    flat_args = [x, w1_cat, b1_cat]
    for w, b in zip(pi_w[1:], pi_b[1:]):
        flat_args.extend([w, b])
    for w, b in zip(vf_w[1:], vf_b[1:]):
        flat_args.extend([w, b])

    # x is tiled over batch; all weights/biases are small full-array blocks
    # with a constant index_map, so they are DMA'd once and stay resident.
    in_specs = [pl.BlockSpec((tb, F), lambda i: (i, 0))]
    for a in flat_args[1:]:
        in_specs.append(pl.BlockSpec(a.shape, lambda i: (0, 0)))
    out_spec = pl.BlockSpec((tb, slab_w), lambda i: (i, 0))

    kernel = functools.partial(
        _acnet_kernel, n_pi_rem, n_vf_rem, pi1, lat_pi, lat_vf, slab_w)

    slab = pl.pallas_call(
        kernel,
        out_shape=jax.ShapeDtypeStruct((B_pad, slab_w), features.dtype),
        grid_spec=pltpu.PrefetchScalarGridSpec(
            num_scalar_prefetch=0,
            grid=(B_pad // tb,),
            in_specs=in_specs,
            out_specs=out_spec,
        ),
        compiler_params=pltpu.CompilerParams(
            dimension_semantics=("parallel",),      # megacore-shardable
            vmem_limit_bytes=32 * 1024 * 1024,      # safe on v7x's 64 MiB VMEM
        ),
    )(*flat_args)

    latent_pi = slab[:B, :lat_pi]
    latent_vf = slab[:B, lat_pi:lat_pi + lat_vf]
    return latent_pi, latent_vf


# ----------------------------------------------------------------------------
# Parameter init (deterministic): xavier_uniform_ weights, zero biases,
# matching ACNet.initialize_weights.
# ----------------------------------------------------------------------------
def _xavier_uniform(key, fan_in, fan_out, dtype=jnp.float32):
    bound = jnp.sqrt(6.0 / (fan_in + fan_out))
    # stored as (in, out) so kernel does x @ W
    return jax.random.uniform(key, (fan_in, fan_out), dtype,
                              minval=-bound, maxval=bound)


def init_acnet_params(key, feature_dim, net_arch):
    def make_stack(key, dims):
        ws, bs = [], []
        d_in = feature_dim
        for d_out in dims:
            key, sub = jax.random.split(key)
            ws.append(_xavier_uniform(sub, d_in, d_out))
            bs.append(jnp.zeros((1, d_out), jnp.float32))
            d_in = d_out
        return ws, bs, key

    pi_w, pi_b, key = make_stack(key, net_arch["pi"])
    vf_w, vf_b, key = make_stack(key, net_arch["vf"])
    return {"pi": (pi_w, pi_b), "vf": (vf_w, vf_b)}


# ----------------------------------------------------------------------------
# Reference (pure JAX) for sanity check.
# ----------------------------------------------------------------------------
def _ref_mlp(x, ws, bs):
    h = x
    for w, b in zip(ws, bs):
        h = jnp.maximum(h @ w + b, 0.0)
    return h


if __name__ == "__main__":
    key = jax.random.PRNGKey(0)

    # Small shapes consistent with the module: ACNet(feature_dim, net_arch)
    feature_dim = 32
    net_arch = {"pi": [64, 64, 32], "vf": [64, 32]}   # value_net_length == 2
    batch = 8

    key, kx, kp = jax.random.split(key, 3)
    features = jax.random.normal(kx, (batch, feature_dim), jnp.float32)
    params = init_acnet_params(kp, feature_dim, net_arch)

    latent_pi, latent_vf = acnet_forward(params, features)
    latent_pi = jax.block_until_ready(latent_pi)
    latent_vf = jax.block_until_ready(latent_vf)

    ref_pi = _ref_mlp(features, *params["pi"])
    ref_vf = _ref_mlp(features, *params["vf"])
    assert latent_pi.shape == (batch, net_arch["pi"][2])
    assert latent_vf.shape == (batch, net_arch["vf"][-1])
    assert jnp.allclose(latent_pi, ref_pi, atol=1e-4, rtol=1e-4)
    assert jnp.allclose(latent_vf, ref_vf, atol=1e-4, rtol=1e-4)

    # Larger, non-divisible batch: exercises batch tiling (grid > 1, megacore
    # parallel axis, remainder padding).
    key, kx2 = jax.random.split(key)
    feats2 = jax.random.normal(kx2, (1000, feature_dim), jnp.float32)
    lp2, lv2 = acnet_forward(params, feats2, batch_tile=256)
    lp2 = jax.block_until_ready(lp2)
    lv2 = jax.block_until_ready(lv2)
    assert jnp.allclose(lp2, _ref_mlp(feats2, *params["pi"]), atol=1e-4, rtol=1e-4)
    assert jnp.allclose(lv2, _ref_mlp(feats2, *params["vf"]), atol=1e-4, rtol=1e-4)

    # value_net_length == 1 branch (single value layer).
    net_arch1 = {"pi": [64, 64, 32], "vf": [64]}
    key, kp1 = jax.random.split(key)
    params1 = init_acnet_params(kp1, feature_dim, net_arch1)
    lp3, lv3 = acnet_forward(params1, features)
    lp3 = jax.block_until_ready(lp3)
    lv3 = jax.block_until_ready(lv3)
    assert lv3.shape == (batch, 64)
    assert jnp.allclose(lp3, _ref_mlp(features, *params1["pi"]), atol=1e-4, rtol=1e-4)
    assert jnp.allclose(lv3, _ref_mlp(features, *params1["vf"]), atol=1e-4, rtol=1e-4)

    print("KERNEL_OK")
</pallas_src>

<mosaic_0001>
module attributes {stable_mosaic.version = 11 : i64} {
  func.func @_acnet_kernel(%arg0: i32, %arg1: memref<8x32xf32, #tpu.memory_space<vmem>>, %arg2: memref<32x128xf32, #tpu.memory_space<vmem>>, %arg3: memref<1x128xf32, #tpu.memory_space<vmem>>, %arg4: memref<64x64xf32, #tpu.memory_space<vmem>>, %arg5: memref<1x64xf32, #tpu.memory_space<vmem>>, %arg6: memref<64x32xf32, #tpu.memory_space<vmem>>, %arg7: memref<1x32xf32, #tpu.memory_space<vmem>>, %arg8: memref<64x32xf32, #tpu.memory_space<vmem>>, %arg9: memref<1x32xf32, #tpu.memory_space<vmem>>, %arg10: memref<8x128xf32, #tpu.memory_space<vmem>>) attributes {dimension_semantics = [#tpu.dimension_semantics<parallel>], iteration_bounds = array<i64: 1>, scalar_prefetch = 0 : i64, scratch_operands = 0 : i64, tpu.core_type = #tpu.core_type<tc>, window_params = [{transform_indices = @transform_0, window_bounds = array<i64: 8, 32>}, {pipeline_mode = #tpu.pipeline_mode<synchronous>, transform_indices = @transform_1, window_bounds = array<i64: 32, 128>}, {pipeline_mode = #tpu.pipeline_mode<synchronous>, transform_indices = @transform_2, window_bounds = array<i64: 1, 128>}, {pipeline_mode = #tpu.pipeline_mode<synchronous>, transform_indices = @transform_3, window_bounds = array<i64: 64, 64>}, {pipeline_mode = #tpu.pipeline_mode<synchronous>, transform_indices = @transform_4, window_bounds = array<i64: 1, 64>}, {pipeline_mode = #tpu.pipeline_mode<synchronous>, transform_indices = @transform_5, window_bounds = array<i64: 64, 32>}, {pipeline_mode = #tpu.pipeline_mode<synchronous>, transform_indices = @transform_6, window_bounds = array<i64: 1, 32>}, {pipeline_mode = #tpu.pipeline_mode<synchronous>, transform_indices = @transform_7, window_bounds = array<i64: 64, 32>}, {pipeline_mode = #tpu.pipeline_mode<synchronous>, transform_indices = @transform_8, window_bounds = array<i64: 1, 32>}, {transform_indices = @transform_9, window_bounds = array<i64: 8, 128>}]} {
    %c0 = arith.constant 0 : index
    %c0_0 = arith.constant 0 : index
    %0 = vector.load %arg1[%c0, %c0_0] : memref<8x32xf32, #tpu.memory_space<vmem>>, vector<8x32xf32>
    %c0_1 = arith.constant 0 : index
    %c0_2 = arith.constant 0 : index
    %1 = vector.load %arg2[%c0_1, %c0_2] : memref<32x128xf32, #tpu.memory_space<vmem>>, vector<32x128xf32>
    %c0_3 = arith.constant 0 : index
    %c0_4 = arith.constant 0 : index
    %2 = vector.load %arg3[%c0_3, %c0_4] : memref<1x128xf32, #tpu.memory_space<vmem>>, vector<1x128xf32>
    %cst = arith.constant dense<0.000000e+00> : vector<8x128xf32>
    %3 = tpu.matmul %0, %1, %cst {dimension_numbers = #tpu.dot_dimension_numbers<[1], [0], [0], [1], [0, 0, 1, 1], [], []>} : vector<8x32xf32>, vector<32x128xf32>, vector<8x128xf32> -> vector<8x128xf32>
    %4 = vector.broadcast %2 : vector<1x128xf32> to vector<8x128xf32>
    %5 = arith.addf %3, %4 : vector<8x128xf32>
    %cst_5 = arith.constant 0.000000e+00 : f32
    %6 = vector.broadcast %cst_5 : f32 to vector<8x128xf32>
    %7 = arith.maximumf %5, %6 : vector<8x128xf32>
    %8 = vector.extract_strided_slice %7 {offsets = [0, 0], sizes = [8, 64], strides = [1, 1]} : vector<8x128xf32> to vector<8x64xf32>
    %9 = vector.extract_strided_slice %7 {offsets = [0, 64], sizes = [8, 64], strides = [1, 1]} : vector<8x128xf32> to vector<8x64xf32>
    %c0_6 = arith.constant 0 : index
    %c0_7 = arith.constant 0 : index
    %10 = vector.load %arg4[%c0_6, %c0_7] : memref<64x64xf32, #tpu.memory_space<vmem>>, vector<64x64xf32>
    %c0_8 = arith.constant 0 : index
    %c0_9 = arith.constant 0 : index
    %11 = vector.load %arg5[%c0_8, %c0_9] : memref<1x64xf32, #tpu.memory_space<vmem>>, vector<1x64xf32>
    %cst_10 = arith.constant dense<0.000000e+00> : vector<8x64xf32>
    %12 = tpu.matmul %8, %10, %cst_10 {dimension_numbers = #tpu.dot_dimension_numbers<[1], [0], [0], [1], [0, 0, 1, 1], [], []>} : vector<8x64xf32>, vector<64x64xf32>, vector<8x64xf32> -> vector<8x64xf32>
    %13 = vector.broadcast %11 : vector<1x64xf32> to vector<8x64xf32>
    %14 = arith.addf %12, %13 : vector<8x64xf32>
    %cst_11 = arith.constant 0.000000e+00 : f32
    %15 = vector.broadcast %cst_11 : f32 to vector<8x64xf32>
    %16 = arith.maximumf %14, %15 : vector<8x64xf32>
    %c0_12 = arith.constant 0 : index
    %c0_13 = arith.constant 0 : index
    %17 = vector.load %arg6[%c0_12, %c0_13] : memref<64x32xf32, #tpu.memory_space<vmem>>, vector<64x32xf32>
    %c0_14 = arith.constant 0 : index
    %c0_15 = arith.constant 0 : index
    %18 = vector.load %arg7[%c0_14, %c0_15] : memref<1x32xf32, #tpu.memory_space<vmem>>, vector<1x32xf32>
    %cst_16 = arith.constant dense<0.000000e+00> : vector<8x32xf32>
    %19 = tpu.matmul %16, %17, %cst_16 {dimension_numbers = #tpu.dot_dimension_numbers<[1], [0], [0], [1], [0, 0, 1, 1], [], []>} : vector<8x64xf32>, vector<64x32xf32>, vector<8x32xf32> -> vector<8x32xf32>
    %20 = vector.broadcast %18 : vector<1x32xf32> to vector<8x32xf32>
    %21 = arith.addf %19, %20 : vector<8x32xf32>
    %cst_17 = arith.constant 0.000000e+00 : f32
    %22 = vector.broadcast %cst_17 : f32 to vector<8x32xf32>
    %23 = arith.maximumf %21, %22 : vector<8x32xf32>
    %c0_18 = arith.constant 0 : index
    %c0_19 = arith.constant 0 : index
    %24 = vector.load %arg8[%c0_18, %c0_19] : memref<64x32xf32, #tpu.memory_space<vmem>>, vector<64x32xf32>
    %c0_20 = arith.constant 0 : index
    %c0_21 = arith.constant 0 : index
    %25 = vector.load %arg9[%c0_20, %c0_21] : memref<1x32xf32, #tpu.memory_space<vmem>>, vector<1x32xf32>
    %cst_22 = arith.constant dense<0.000000e+00> : vector<8x32xf32>
    %26 = tpu.matmul %9, %24, %cst_22 {dimension_numbers = #tpu.dot_dimension_numbers<[1], [0], [0], [1], [0, 0, 1, 1], [], []>} : vector<8x64xf32>, vector<64x32xf32>, vector<8x32xf32> -> vector<8x32xf32>
    %27 = vector.broadcast %25 : vector<1x32xf32> to vector<8x32xf32>
    %28 = arith.addf %26, %27 : vector<8x32xf32>
    %cst_23 = arith.constant 0.000000e+00 : f32
    %29 = vector.broadcast %cst_23 : f32 to vector<8x32xf32>
    %30 = arith.maximumf %28, %29 : vector<8x32xf32>
    %cst_24 = arith.constant 0.000000e+00 : f32
    %31 = vector.broadcast %cst_24 : f32 to vector<8x64xf32>
    %32 = tpu.concatenate %23, %30, %31 in 1 : vector<8x32xf32>, vector<8x32xf32>, vector<8x64xf32> -> vector<8x128xf32>
    %c0_25 = arith.constant 0 : index
    %c0_26 = arith.constant 0 : index
    %33 = vector.load %arg10[%c0_25, %c0_26] : memref<8x128xf32, #tpu.memory_space<vmem>>, vector<8x128xf32>
    tpu.vector_store %arg10[%c0_25, %c0_26], %32 {strides = array<i32>} : memref<8x128xf32, #tpu.memory_space<vmem>>, vector<8x128xf32>,
    return
  }
  func.func @transform_0(%arg0: i32) -> (i32, i32) {
    %c0_i32 = arith.constant 0 : i32
    %c0_i32_0 = arith.constant 0 : i32
    return %arg0, %c0_i32 : i32, i32
  }
  func.func @transform_1(%arg0: i32) -> (i32, i32) {
    %c0_i32 = arith.constant 0 : i32
    %c0_i32_0 = arith.constant 0 : i32
    %c0_i32_1 = arith.constant 0 : i32
    return %c0_i32, %c0_i32_0 : i32, i32
  }
  func.func @transform_2(%arg0: i32) -> (i32, i32) {
    %c0_i32 = arith.constant 0 : i32
    %c0_i32_0 = arith.constant 0 : i32
    %c0_i32_1 = arith.constant 0 : i32
    return %c0_i32, %c0_i32_0 : i32, i32
  }
  func.func @transform_3(%arg0: i32) -> (i32, i32) {
    %c0_i32 = arith.constant 0 : i32
    %c0_i32_0 = arith.constant 0 : i32
    %c0_i32_1 = arith.constant 0 : i32
    return %c0_i32, %c0_i32_0 : i32, i32
  }
  func.func @transform_4(%arg0: i32) -> (i32, i32) {
    %c0_i32 = arith.constant 0 : i32
    %c0_i32_0 = arith.constant 0 : i32
    %c0_i32_1 = arith.constant 0 : i32
    return %c0_i32, %c0_i32_0 : i32, i32
  }
  func.func @transform_5(%arg0: i32) -> (i32, i32) {
    %c0_i32 = arith.constant 0 : i32
    %c0_i32_0 = arith.constant 0 : i32
    %c0_i32_1 = arith.constant 0 : i32
    return %c0_i32, %c0_i32_0 : i32, i32
  }
  func.func @transform_6(%arg0: i32) -> (i32, i32) {
    %c0_i32 = arith.constant 0 : i32
    %c0_i32_0 = arith.constant 0 : i32
    %c0_i32_1 = arith.constant 0 : i32
    return %c0_i32, %c0_i32_0 : i32, i32
  }
  func.func @transform_7(%arg0: i32) -> (i32, i32) {
    %c0_i32 = arith.constant 0 : i32
    %c0_i32_0 = arith.constant 0 : i32
    %c0_i32_1 = arith.constant 0 : i32
    return %c0_i32, %c0_i32_0 : i32, i32
  }
  func.func @transform_8(%arg0: i32) -> (i32, i32) {
    %c0_i32 = arith.constant 0 : i32
    %c0_i32_0 = arith.constant 0 : i32
    %c0_i32_1 = arith.constant 0 : i32
    return %c0_i32, %c0_i32_0 : i32, i32
  }
  func.func @transform_9(%arg0: i32) -> (i32, i32) {
    %c0_i32 = arith.constant 0 : i32
    %c0_i32_0 = arith.constant 0 : i32
    return %arg0, %c0_i32 : i32, i32
  }
}

</mosaic_0001>

<llo_original>
// kernel: tpu_custom_call.1
$region0: #{tpu_custom_call.1}
  #allocation0 [shape = 'u32[]', space=smem, size = 0x4, offset = 0x4, fixed_abs, tag = 'smem constant byte address 0x4 - core index']
  #allocation1 [shape = 'u32[144,128]{1,0:T(1,128)}', space=vmem, size = 0x12000, scoped, tag = 'internal scratch']
  %s0 = inlined_call_operand.vmem [shape: f32[8,32], index: 0, kind: input, shape index: {}]
  %s1 = inlined_call_operand.vmem [shape: f32[32,128], index: 1, kind: input, shape index: {}]
  %s2 = inlined_call_operand.vmem [shape: f32[1,128], index: 2, kind: input, shape index: {}]
  %s3 = inlined_call_operand.vmem [shape: f32[64,64], index: 3, kind: input, shape index: {}]
  %s4 = inlined_call_operand.vmem [shape: f32[1,64], index: 4, kind: input, shape index: {}]
  %s5 = inlined_call_operand.vmem [shape: f32[64,32], index: 5, kind: input, shape index: {}]
  %s6 = inlined_call_operand.vmem [shape: f32[1,32], index: 6, kind: input, shape index: {}]
  %s7 = inlined_call_operand.vmem [shape: f32[64,32], index: 7, kind: input, shape index: {}]
  %s8 = inlined_call_operand.vmem [shape: f32[1,32], index: 8, kind: input, shape index: {}]
  %s9 = inlined_call_operand.hbm [shape: f32[8,128], index: 9, kind: output, shape index: {}]
  %s10 = sld [smem:[#allocation0]]
  $region46: #{tpu_custom_call.1} parent=0
    _
  %s12 = ssub.s32 1, %s10
  %s13 = scalar_select 0, %s12, %s10
  $region1: #{tpu_custom_call.1} parent=0
    #allocation2 [shape = 'u8[4096]{0}', space=vmem, size = 0x1000, scoped, tag = 'output window, operand 0, single buffered']
    #allocation3 [shape = 's32[1]{0}', space=sflag, size = 0x4, scoped, tag = 'scoped memory for tpu_custom_call.1']
    %14 = vsyncpa [#allocation3], 0
    // Predicated region
    $region2: #{tpu_custom_call.1} parent=1 // pred_check
      _
    $region3: #{tpu_custom_call.1} parent=1 // pred_check_branch
      %16 = sbr.rel (0) target = $region5
    $region4: #{tpu_custom_call.1} parent=1 // pred_region
      _
    $region5: #{tpu_custom_call.1} parent=1 // pred_fallthru
      _
    // Predicated region
    $region6: #{tpu_custom_call.1} parent=1 // pred_check
      _
    $region7: #{tpu_custom_call.1} parent=1 // pred_check_branch
      %18 = sbr.rel (0) target = $region9
    $region8: #{tpu_custom_call.1} parent=1 // pred_region
      _
    $region9: #{tpu_custom_call.1} parent=1 // pred_fallthru
      _
    // Predicated region
    $region10: #{tpu_custom_call.1} parent=1 // pred_check
      _
    $region11: #{tpu_custom_call.1} parent=1 // pred_check_branch
      %20 = sbr.rel (0) target = $region13
    $region12: #{tpu_custom_call.1} parent=1 // pred_region
      _
    $region13: #{tpu_custom_call.1} parent=1 // pred_fallthru
      _
    // Predicated region
    $region14: #{tpu_custom_call.1} parent=1 // pred_check
      _
    $region15: #{tpu_custom_call.1} parent=1 // pred_check_branch
      %22 = sbr.rel (0) target = $region17
    $region16: #{tpu_custom_call.1} parent=1 // pred_region
      _
    $region17: #{tpu_custom_call.1} parent=1 // pred_fallthru
      _
    // Predicated region
    $region18: #{tpu_custom_call.1} parent=1 // pred_check
      _
    $region19: #{tpu_custom_call.1} parent=1 // pred_check_branch
      %24 = sbr.rel (0) target = $region21
    $region20: #{tpu_custom_call.1} parent=1 // pred_region
      _
    $region21: #{tpu_custom_call.1} parent=1 // pred_fallthru
      _
    // Predicated region
    $region22: #{tpu_custom_call.1} parent=1 // pred_check
      _
    $region23: #{tpu_custom_call.1} parent=1 // pred_check_branch
      %26 = sbr.rel (0) target = $region25
    $region24: #{tpu_custom_call.1} parent=1 // pred_region
      _
    $region25: #{tpu_custom_call.1} parent=1 // pred_fallthru
      _
    // Predicated region
    $region26: #{tpu_custom_call.1} parent=1 // pred_check
      _
    $region27: #{tpu_custom_call.1} parent=1 // pred_check_branch
      %28 = sbr.rel (0) target = $region29
    $region28: #{tpu_custom_call.1} parent=1 // pred_region
      _
    $region29: #{tpu_custom_call.1} parent=1 // pred_fallthru
      _
    // Predicated region
    $region30: #{tpu_custom_call.1} parent=1 // pred_check
      _
    $region31: #{tpu_custom_call.1} parent=1 // pred_check_branch
      %30 = sbr.rel (0) target = $region33
    $region32: #{tpu_custom_call.1} parent=1 // pred_region
      _
    $region33: #{tpu_custom_call.1} parent=1 // pred_fallthru
      _
    // Predicated region
    $region34: #{tpu_custom_call.1} parent=1 // pred_check
      _
    $region35: #{tpu_custom_call.1} parent=1 // pred_check_branch
      %32 = sbr.rel (0) target = $region37
    $region36: #{tpu_custom_call.1} parent=1 // pred_region
      _
    $region37: #{tpu_custom_call.1} parent=1 // pred_fallthru
      _
    %v33 = vld [vmem:[%s0] sm:$0xff]
    %v34 = vld [vmem:[%s1] sm:$0xff]
    %v35 = vld [vmem:[%s1 + $0x8] sm:$0xff]
    %v36 = vld [vmem:[%s1 + $0x10] sm:$0xff]
    %v37 = vld [vmem:[%s1 + $0x18] sm:$0xff]
    %v38 = vld [vmem:[%s2] sm:$0x1]
    %v40 = vlaneseq
    %v41 = vshrl.u32 %v40, 7
    %v42 = vsub.s32 0, %v41
    %v43 = vrot.slane %v38, %v42
    %vm45 = vcmask 261120
    %v47 = vsel %vm45, %v33, 0
    %49 = vmatprep.subr.mxu0 0.0
    %50 = vmatpush1.msra.mxu0 %v34
    %51 = vmatprep.subr.mxu0 0.0
    %52 = vmatpush1.msra.mxu0 %v35
    %53 = vmatprep.subr.mxu0 0.0
    %54 = vmatpush1.msra.mxu0 %v36
    %55 = vmatprep.subr.mxu0 0.0
    %56 = vmatpush1.msra.mxu0 %v37
    %57 = vmatprep.subr.mxu0 0.0
    %58 = vmatpush1.msra.mxu0 0.0
    %59 = vmatprep.subr.mxu0 0.0
    %60 = vmatpush1.msra.mxu0 0.0
    %61 = vmatprep.subr.mxu0 0.0
    %62 = vmatpush1.msra.mxu0 0.0
    %63 = vmatprep.subr.mxu0 0.0
    %64 = vmatpush1.msra.mxu0 0.0
    %65 = vmatprep.subr.mxu0 0.0
    %66 = vmatpush1.msra.mxu0 0.0
    %67 = vmatprep.subr.mxu0 0.0
    %68 = vmatpush1.msra.mxu0 0.0
    %69 = vmatprep.subr.mxu0 0.0
    %70 = vmatpush1.msra.mxu0 0.0
    %71 = vmatprep.subr.mxu0 0.0
    %72 = vmatpush1.msra.mxu0 0.0
    %73 = vmatprep.subr.mxu0 0.0
    %74 = vmatpush1.msra.mxu0 0.0
    %75 = vmatprep.subr.mxu0 0.0
    %76 = vmatpush1.msra.mxu0 0.0
    %77 = vmatprep.subr.mxu0 0.0
    %78 = vmatpush1.msra.mxu0 0.0
    %79 = vmatprep.subr.mxu0 0.0
    %80 = vmatpush1.msra.mxu0 0.0
    %81 = vmatprep.subr.mxu0 0.0
    %82 = vmatpush1.msra.mxu0 0.0
    %83 = vmatprep.subr.mxu0 0.0
    %84 = vmatpush1.msra.mxu0 0.0
    %85 = vmatprep.subr.mxu0 0.0
    %86 = vmatpush1.msra.mxu0 0.0
    %87 = vmatprep.subr.mxu0 0.0
    %88 = vmatpush1.msra.mxu0 0.0
    %89 = vmatprep.subr.mxu0 0.0
    %90 = vmatpush1.msra.mxu0 0.0
    %91 = vmatprep.subr.mxu0 0.0
    %92 = vmatpush1.msra.mxu0 0.0
    %93 = vmatprep.subr.mxu0 0.0
    %94 = vmatpush1.msra.mxu0 0.0
    %95 = vmatprep.subr.mxu0 0.0
    %96 = vmatpush1.msra.mxu0 0.0
    %97 = vmatprep.subr.mxu0 0.0
    %98 = vmatpush1.msra.mxu0 0.0
    %99 = vmatprep.subr.mxu0 0.0
    %100 = vmatpush1.msra.mxu0 0.0
    %101 = vmatprep.subr.mxu0 0.0
    %102 = vmatpush1.msra.mxu0 0.0
    %103 = vmatprep.subr.mxu0 0.0
    %104 = vmatpush1.msra.mxu0 0.0
    %105 = vmatprep.subr.mxu0 0.0
    %106 = vmatpush1.msra.mxu0 0.0
    %107 = vmatprep.subr.mxu0 0.0
    %108 = vmatpush1.msra.mxu0 0.0
    %109 = vmatprep.subr.mxu0 0.0
    %110 = vmatpush1.msra.mxu0 0.0
    %111 = vmatprep.subr.mxu0 0.0
    %112 = vmatpush1.msra.mxu0 0.0
    %113 = vmatprep.mubr.f32.mxu0 0.0
    %114 = vmatmul.mubr.f32.gmra.mrb[0].mxu0 %v47
    %v115 = vpop.f32.mrb[0].mxu0
    %v116 = vadd.f32 %v43, %v115
    %v117 = vpop.f32.mrb[0].mxu0
    %118 = vdwg.mxu0
    %v119 = vmax.f32 %v116, 0.0
    %v120 = vld [vmem:[%s3] sm:$0xff]
    %v121 = vld [vmem:[%s3 + $0x8] sm:$0xff]
    %v122 = vld [vmem:[%s3 + $0x10] sm:$0xff]
    %v123 = vld [vmem:[%s3 + $0x18] sm:$0xff]
    %v124 = vld [vmem:[%s3 + $0x20] sm:$0xff]
    %v125 = vld [vmem:[%s3 + $0x28] sm:$0xff]
    %v126 = vld [vmem:[%s3 + $0x30] sm:$0xff]
    %v127 = vld [vmem:[%s3 + $0x38] sm:$0xff]
    %v128 = vld [vmem:[%s4] sm:$0x1]
    %v130 = vlaneseq
    %v131 = vshrl.u32 %v130, 7
    %v132 = vsub.s32 0, %v131
    %v133 = vrot.slane %v128, %v132
    %vm135 = vcmask 523264
    %v137 = vsel %vm135, %v119, 0
    %139 = vmatprep.subr.mxu0 0.0
    %140 = vmatpush1.msra.mxu0 %v120
    %141 = vmatprep.subr.mxu0 0.0
    %142 = vmatpush1.msra.mxu0 %v121
    %143 = vmatprep.subr.mxu0 0.0
    %144 = vmatpush1.msra.mxu0 %v122
    %145 = vmatprep.subr.mxu0 0.0
    %146 = vmatpush1.msra.mxu0 %v123
    %147 = vmatprep.subr.mxu0 0.0
    %148 = vmatpush1.msra.mxu0 %v124
    %149 = vmatprep.subr.mxu0 0.0
    %150 = vmatpush1.msra.mxu0 %v125
    %151 = vmatprep.subr.mxu0 0.0
    %152 = vmatpush1.msra.mxu0 %v126
    %153 = vmatprep.subr.mxu0 0.0
    %154 = vmatpush1.msra.mxu0 %v127
    %155 = vmatprep.subr.mxu0 0.0
    %156 = vmatpush1.msra.mxu0 0.0
    %157 = vmatprep.subr.mxu0 0.0
    %158 = vmatpush1.msra.mxu0 0.0
    %159 = vmatprep.subr.mxu0 0.0
    %160 = vmatpush1.msra.mxu0 0.0
    %161 = vmatprep.subr.mxu0 0.0
    %162 = vmatpush1.msra.mxu0 0.0
    %163 = vmatprep.subr.mxu0 0.0
    %164 = vmatpush1.msra.mxu0 0.0
    %165 = vmatprep.subr.mxu0 0.0
    %166 = vmatpush1.msra.mxu0 0.0
    %167 = vmatprep.subr.mxu0 0.0
    %168 = vmatpush1.msra.mxu0 0.0
    %169 = vmatprep.subr.mxu0 0.0
    %170 = vmatpush1.msra.mxu0 0.0
    %171 = vmatprep.subr.mxu0 0.0
    %172 = vmatpush1.msra.mxu0 0.0
    %173 = vmatprep.subr.mxu0 0.0
    %174 = vmatpush1.msra.mxu0 0.0
    %175 = vmatprep.subr.mxu0 0.0
    %176 = vmatpush1.msra.mxu0 0.0
    %177 = vmatprep.subr.mxu0 0.0
    %178 = vmatpush1.msra.mxu0 0.0
    %179 = vmatprep.subr.mxu0 0.0
    %180 = vmatpush1.msra.mxu0 0.0
    %181 = vmatprep.subr.mxu0 0.0
    %182 = vmatpush1.msra.mxu0 0.0
    %183 = vmatprep.subr.mxu0 0.0
    %184 = vmatpush1.msra.mxu0 0.0
    %185 = vmatprep.subr.mxu0 0.0
    %186 = vmatpush1.msra.mxu0 0.0
    %187 = vmatprep.subr.mxu0 0.0
    %188 = vmatpush1.msra.mxu0 0.0
    %189 = vmatprep.subr.mxu0 0.0
    %190 = vmatpush1.msra.mxu0 0.0
    %191 = vmatprep.subr.mxu0 0.0
    %192 = vmatpush1.msra.mxu0 0.0
    %193 = vmatprep.subr.mxu0 0.0
    %194 = vmatpush1.msra.mxu0 0.0
    %195 = vmatprep.subr.mxu0 0.0
    %196 = vmatpush1.msra.mxu0 0.0
    %197 = vmatprep.subr.mxu0 0.0
    %198 = vmatpush1.msra.mxu0 0.0
    %199 = vmatprep.subr.mxu0 0.0
    %200 = vmatpush1.msra.mxu0 0.0
    %201 = vmatprep.subr.mxu0 0.0
    %202 = vmatpush1.msra.mxu0 0.0
    %203 = vmatprep.mubr.f32.mxu0 0.0
    %204 = vmatmul.mubr.f32.gmra.mrb[0].mxu0 %v137
    %v205 = vpop.f32.mrb[0].mxu0
    %v206 = vadd.f32 %v133, %v205
    %v207 = vpop.f32.mrb[0].mxu0
    %208 = vdwg.mxu0
    %v209 = vmax.f32 %v206, 0.0
    %v210 = vld [vmem:[%s5] sm:$0xff]
    %v211 = vld [vmem:[%s5 + $0x8] sm:$0xff]
    %v212 = vld [vmem:[%s5 + $0x10] sm:$0xff]
    %v213 = vld [vmem:[%s5 + $0x18] sm:$0xff]
    %v214 = vld [vmem:[%s5 + $0x20] sm:$0xff]
    %v215 = vld [vmem:[%s5 + $0x28] sm:$0xff]
    %v216 = vld [vmem:[%s5 + $0x30] sm:$0xff]
    %v217 = vld [vmem:[%s5 + $0x38] sm:$0xff]
    %v218 = vld [vmem:[%s6] sm:$0x1]
    %v220 = vlaneseq
    %v221 = vshrl.u32 %v220, 7
    %v222 = vsub.s32 0, %v221
    %v223 = vrot.slane %v218, %v222
    %v226 = vsel %vm135, %v209, 0
    %228 = vmatprep.subr.mxu0 0.0
    %229 = vmatpush1.msra.mxu0 %v210
    %230 = vmatprep.subr.mxu0 0.0
    %231 = vmatpush1.msra.mxu0 %v211
    %232 = vmatprep.subr.mxu0 0.0
    %233 = vmatpush1.msra.mxu0 %v212
    %234 = vmatprep.subr.mxu0 0.0
    %235 = vmatpush1.msra.mxu0 %v213
    %236 = vmatprep.subr.mxu0 0.0
    %237 = vmatpush1.msra.mxu0 %v214
    %238 = vmatprep.subr.mxu0 0.0
    %239 = vmatpush1.msra.mxu0 %v215
    %240 = vmatprep.subr.mxu0 0.0
    %241 = vmatpush1.msra.mxu0 %v216
    %242 = vmatprep.subr.mxu0 0.0
    %243 = vmatpush1.msra.mxu0 %v217
    %244 = vmatprep.subr.mxu0 0.0
    %245 = vmatpush1.msra.mxu0 0.0
    %246 = vmatprep.subr.mxu0 0.0
    %247 = vmatpush1.msra.mxu0 0.0
    %248 = vmatprep.subr.mxu0 0.0
    %249 = vmatpush1.msra.mxu0 0.0
    %250 = vmatprep.subr.mxu0 0.0
    %251 = vmatpush1.msra.mxu0 0.0
    %252 = vmatprep.subr.mxu0 0.0
    %253 = vmatpush1.msra.mxu0 0.0
    %254 = vmatprep.subr.mxu0 0.0
    %255 = vmatpush1.msra.mxu0 0.0
    %256 = vmatprep.subr.mxu0 0.0
    %257 = vmatpush1.msra.mxu0 0.0
    %258 = vmatprep.subr.mxu0 0.0
    %259 = vmatpush1.msra.mxu0 0.0
    %260 = vmatprep.subr.mxu0 0.0
    %261 = vmatpush1.msra.mxu0 0.0
    %262 = vmatprep.subr.mxu0 0.0
    %263 = vmatpush1.msra.mxu0 0.0
    %264 = vmatprep.subr.mxu0 0.0
    %265 = vmatpush1.msra.mxu0 0.0
    %266 = vmatprep.subr.mxu0 0.0
    %267 = vmatpush1.msra.mxu0 0.0
    %268 = vmatprep.subr.mxu0 0.0
    %269 = vmatpush1.msra.mxu0 0.0
    %270 = vmatprep.subr.mxu0 0.0
    %271 = vmatpush1.msra.mxu0 0.0
    %272 = vmatprep.subr.mxu0 0.0
    %273 = vmatpush1.msra.mxu0 0.0
    %274 = vmatprep.subr.mxu0 0.0
    %275 = vmatpush1.msra.mxu0 0.0
    %276 = vmatprep.subr.mxu0 0.0
    %277 = vmatpush1.msra.mxu0 0.0
    %278 = vmatprep.subr.mxu0 0.0
    %279 = vmatpush1.msra.mxu0 0.0
    %280 = vmatprep.subr.mxu0 0.0
    %281 = vmatpush1.msra.mxu0 0.0
    %282 = vmatprep.subr.mxu0 0.0
    %283 = vmatpush1.msra.mxu0 0.0
    %284 = vmatprep.subr.mxu0 0.0
    %285 = vmatpush1.msra.mxu0 0.0
    %286 = vmatprep.subr.mxu0 0.0
    %287 = vmatpush1.msra.mxu0 0.0
    %288 = vmatprep.subr.mxu0 0.0
    %289 = vmatpush1.msra.mxu0 0.0
    %290 = vmatprep.subr.mxu0 0.0
    %291 = vmatpush1.msra.mxu0 0.0
    %292 = vmatprep.mubr.f32.mxu0 0.0
    %293 = vmatmul.mubr.f32.gmra.mrb[0].mxu0 %v226
    %v294 = vpop.f32.mrb[0].mxu0
    %v295 = vadd.f32 %v223, %v294
    %v296 = vpop.f32.mrb[0].mxu0
    %297 = vdwg.mxu0
    %v298 = vmax.f32 %v295, 0.0
    %v299 = vld [vmem:[%s7] sm:$0xff]
    %v300 = vld [vmem:[%s7 + $0x8] sm:$0xff]
    %v301 = vld [vmem:[%s7 + $0x10] sm:$0xff]
    %v302 = vld [vmem:[%s7 + $0x18] sm:$0xff]
    %v303 = vld [vmem:[%s7 + $0x20] sm:$0xff]
    %v304 = vld [vmem:[%s7 + $0x28] sm:$0xff]
    %v305 = vld [vmem:[%s7 + $0x30] sm:$0xff]
    %v306 = vld [vmem:[%s7 + $0x38] sm:$0xff]
    %v307 = vld [vmem:[%s8] sm:$0x1]
    %v309 = vlaneseq
    %v310 = vshrl.u32 %v309, 7
    %v311 = vsub.s32 0, %v310
    %v312 = vrot.slane %v307, %v311
    %314 = vrot.lane.b32.xlu0 %v119, 64
    %v315 = vpop.permute.xlu0 %314
    %v316 = vsel %vm135, %v315, 0
    %318 = vmatprep.subr.mxu0 0.0
    %319 = vmatpush1.msra.mxu0 %v299
    %320 = vmatprep.subr.mxu0 0.0
    %321 = vmatpush1.msra.mxu0 %v300
    %322 = vmatprep.subr.mxu0 0.0
    %323 = vmatpush1.msra.mxu0 %v301
    %324 = vmatprep.subr.mxu0 0.0
    %325 = vmatpush1.msra.mxu0 %v302
    %326 = vmatprep.subr.mxu0 0.0
    %327 = vmatpush1.msra.mxu0 %v303
    %328 = vmatprep.subr.mxu0 0.0
    %329 = vmatpush1.msra.mxu0 %v304
    %330 = vmatprep.subr.mxu0 0.0
    %331 = vmatpush1.msra.mxu0 %v305
    %332 = vmatprep.subr.mxu0 0.0
    %333 = vmatpush1.msra.mxu0 %v306
    %334 = vmatprep.subr.mxu0 0.0
    %335 = vmatpush1.msra.mxu0 0.0
    %336 = vmatprep.subr.mxu0 0.0
    %337 = vmatpush1.msra.mxu0 0.0
    %338 = vmatprep.subr.mxu0 0.0
    %339 = vmatpush1.msra.mxu0 0.0
    %340 = vmatprep.subr.mxu0 0.0
    %341 = vmatpush1.msra.mxu0 0.0
    %342 = vmatprep.subr.mxu0 0.0
    %343 = vmatpush1.msra.mxu0 0.0
    %344 = vmatprep.subr.mxu0 0.0
    %345 = vmatpush1.msra.mxu0 0.0
    %346 = vmatprep.subr.mxu0 0.0
    %347 = vmatpush1.msra.mxu0 0.0
    %348 = vmatprep.subr.mxu0 0.0
    %349 = vmatpush1.msra.mxu0 0.0
    %350 = vmatprep.subr.mxu0 0.0
    %351 = vmatpush1.msra.mxu0 0.0
    %352 = vmatprep.subr.mxu0 0.0
    %353 = vmatpush1.msra.mxu0 0.0
    %354 = vmatprep.subr.mxu0 0.0
    %355 = vmatpush1.msra.mxu0 0.0
    %356 = vmatprep.subr.mxu0 0.0
    %357 = vmatpush1.msra.mxu0 0.0
    %358 = vmatprep.subr.mxu0 0.0
    %359 = vmatpush1.msra.mxu0 0.0
    %360 = vmatprep.subr.mxu0 0.0
    %361 = vmatpush1.msra.mxu0 0.0
    %362 = vmatprep.subr.mxu0 0.0
    %363 = vmatpush1.msra.mxu0 0.0
    %364 = vmatprep.subr.mxu0 0.0
    %365 = vmatpush1.msra.mxu0 0.0
    %366 = vmatprep.subr.mxu0 0.0
    %367 = vmatpush1.msra.mxu0 0.0
    %368 = vmatprep.subr.mxu0 0.0
    %369 = vmatpush1.msra.mxu0 0.0
    %370 = vmatprep.subr.mxu0 0.0
    %371 = vmatpush1.msra.mxu0 0.0
    %372 = vmatprep.subr.mxu0 0.0
    %373 = vmatpush1.msra.mxu0 0.0
    %374 = vmatprep.subr.mxu0 0.0
    %375 = vmatpush1.msra.mxu0 0.0
    %376 = vmatprep.subr.mxu0 0.0
    %377 = vmatpush1.msra.mxu0 0.0
    %378 = vmatprep.subr.mxu0 0.0
    %379 = vmatpush1.msra.mxu0 0.0
    %380 = vmatprep.subr.mxu0 0.0
    %381 = vmatpush1.msra.mxu0 0.0
    %382 = vmatprep.mubr.f32.mxu0 0.0
    %383 = vmatmul.mubr.f32.gmra.mrb[0].mxu0 %v316
    %v384 = vpop.f32.mrb[0].mxu0
    %v385 = vadd.f32 %v312, %v384
    %v386 = vpop.f32.mrb[0].mxu0
    %387 = vdwg.mxu0
    %v388 = vmax.f32 %v385, 0.0
    %390 = vrot.lane.b32.xlu0 %v388, 32
    %v391 = vpop.permute.xlu0 %390
    %v393 = vsel %vm45, %v298, %v391
    %v394 = vsel %vm135, %v393, 0.0
    %395 = vst [vmem:[#allocation2] sm:$0xff] %v394
    // Predicated region
    $region38: #{tpu_custom_call.1} parent=1 // pred_check
      _
    $region39: #{tpu_custom_call.1} parent=1 // pred_check_branch
      %397 = sbr.rel (0) target = $region41
    $region40: #{tpu_custom_call.1} parent=1 // pred_region
      %s399 = ssub.s32 128, 128
      %400 = vsyncadd [#allocation3], %s399
      %s402 = sshll.u32 [#allocation2], 4
      %s403 = int_to_ptr.vmem [resolvable:$true] %s402
      %405 = dma.vmem_to_hbm [thread:$0]  %s403, 128, %s9, [#allocation3]
    $region41: #{tpu_custom_call.1} parent=1 // pred_fallthru
      _
    // Predicated region
    $region42: #{tpu_custom_call.1} parent=1 // pred_check
      _
    $region43: #{tpu_custom_call.1} parent=1 // pred_check_branch
      %407 = sbr.rel (0) target = $region45
    $region44: #{tpu_custom_call.1} parent=1 // pred_region
      %408 = dma.done [#allocation3], 128
    $region45: #{tpu_custom_call.1} parent=1 // pred_fallthru
      _
    %409 = vsyncpa [#allocation3], 1

</llo_original>
